<compile_context>
chip_gen: v7x
topology: tpu7x:2x2x1
jax: 0.10.0
libtpu: 0.0.40
codegen_flags: <defaults>
</compile_context>

<pallas_src>
import jax
import jax.numpy as jnp
from jax.experimental import pallas as pl
from jax.experimental.pallas import tpu as pltpu


def munet_kernel(x_ref, w1_ref, b1_ref, w2_ref, b2_ref, w3_ref, b3_ref, out_ref):
    # x_ref: (bt, D) batch tile. Transpose once (XLU, otherwise idle) so that
    # batch lives on the lane axis for the rest of the kernel.
    xt = x_ref[...].T                                                  # (D, bt)

    # fc1 + relu : (128, D) @ (D, bt) on the MXU, f32 accumulate.
    h1 = jnp.dot(w1_ref[...], xt, preferred_element_type=jnp.float32)
    h1 = jnp.maximum(h1 + b1_ref[...], 0.0)                            # (128, bt)

    # fc2 + relu : (64, 128) @ (128, bt)
    h2 = jnp.dot(w2_ref[...], h1, preferred_element_type=jnp.float32)
    h2 = jnp.maximum(h2 + b2_ref[...], 0.0)                            # (64, bt)

    # fc3 (N=1): keep it off the MXU. VPU multiply by the (64,1) w3 column and
    # reduce over sublanes -> lane-dense (1, bt) row. b3 is an SMEM scalar.
    mu = jnp.sum(h2 * w3_ref[...], axis=0, keepdims=True) + b3_ref[0]  # (1, bt)

    # tanh on the EUP, scale, lane-dense unmasked store.
    out_ref[...] = jnp.tanh(mu) * 2.0


def munet_forward(x, params, *, block_b=1024):
    """x: (B, state_dim) f32. params: dict (PyTorch (out,in) weight layout)."""
    B, D = x.shape
    w1, b1, w2, b2, w3, b3 = (params["w1"], params["b1"], params["w2"],
                              params["b2"], params["w3"], params["b3"])

    # Batch tile: lane-dense (multiple of 128), capped at block_b.
    block_b = max(128, (block_b // 128) * 128)
    bt = min(block_b, max(128, ((B + 127) // 128) * 128))
    g = pl.cdiv(B, bt)
    b_pad = g * bt
    if b_pad != B:
        x = jnp.pad(x, ((0, b_pad - B), (0, 0)))

    out_row = pl.pallas_call(
        munet_kernel,
        out_shape=jax.ShapeDtypeStruct((1, b_pad), jnp.float32),
        grid=(g,),
        in_specs=[
            pl.BlockSpec((bt, D), lambda i: (i, 0)),       # x tile (streams)
            pl.BlockSpec((128, D), lambda i: (0, 0)),      # w1 (resident)
            pl.BlockSpec((128, 1), lambda i: (0, 0)),      # b1
            pl.BlockSpec((64, 128), lambda i: (0, 0)),     # w2
            pl.BlockSpec((64, 1), lambda i: (0, 0)),       # b2
            pl.BlockSpec((64, 1), lambda i: (0, 0)),       # w3 column
            pl.BlockSpec(memory_space=pltpu.MemorySpace.SMEM),  # b3 scalar (1,)
        ],
        out_specs=pl.BlockSpec((1, bt), lambda i: (0, i)),  # lane-dense row
        compiler_params=pltpu.CompilerParams(
            dimension_semantics=("parallel",)),
    )(x, w1, b1, w2, b2, w3, b3)

    # Back to the PyTorch-shaped (B, 1) result in the wrapper.
    return out_row[0, :B].reshape(B, 1)


def init_params(state_dim, key):
    """Deterministic init mimicking nn.Linear's uniform(-1/sqrt(fan_in), ...).
    Weights are stored in PyTorch (out_features, in_features) layout; biases as
    (out_features, 1) columns; w3 as a (64, 1) column; b3 as a (1,) scalar."""
    ks = jax.random.split(key, 6)

    def linear(kw, kb, fan_in, fan_out):
        bound = 1.0 / jnp.sqrt(jnp.float32(fan_in))
        w = jax.random.uniform(kw, (fan_out, fan_in), jnp.float32, -bound, bound)
        b = jax.random.uniform(kb, (fan_out, 1), jnp.float32, -bound, bound)
        return w, b

    w1, b1 = linear(ks[0], ks[1], state_dim, 128)
    w2, b2 = linear(ks[2], ks[3], 128, 64)
    w3, b3 = linear(ks[4], ks[5], 64, 1)
    return {"w1": w1, "b1": b1,
            "w2": w2, "b2": b2,
            "w3": w3.T,                 # (64, 1) column for the VPU fc3
            "b3": b3.reshape(1)}        # (1,) scalar for SMEM


if __name__ == "__main__":
    key = jax.random.PRNGKey(0)
    k_x, k_p = jax.random.split(key)

    B, state_dim = 8, 32
    x = jax.random.normal(k_x, (B, state_dim), jnp.float32)
    params = init_params(state_dim, k_p)

    mu = munet_forward(x, params)
    mu = jax.block_until_ready(mu)

    # Reference check in plain JAX (full-precision matmuls).
    hp = jax.lax.Precision.HIGHEST
    h1 = jnp.maximum(jnp.dot(x, params["w1"].T, precision=hp) + params["b1"].T, 0.0)
    h2 = jnp.maximum(jnp.dot(h1, params["w2"].T, precision=hp) + params["b2"].T, 0.0)
    ref = jnp.tanh(jnp.dot(h2, params["w3"], precision=hp) + params["b3"]) * 2.0

    assert mu.shape == (B, 1)
    assert jnp.allclose(mu, ref, atol=1e-4, rtol=1e-4)

    print("KERNEL_OK")
</pallas_src>

<mosaic_0001>
module attributes {stable_mosaic.version = 11 : i64} {
  func.func @munet_kernel(%arg0: i32, %arg1: memref<128x32xf32, #tpu.memory_space<vmem>>, %arg2: memref<128x32xf32, #tpu.memory_space<vmem>>, %arg3: memref<128x1xf32, #tpu.memory_space<vmem>>, %arg4: memref<64x128xf32, #tpu.memory_space<vmem>>, %arg5: memref<64x1xf32, #tpu.memory_space<vmem>>, %arg6: memref<64x1xf32, #tpu.memory_space<vmem>>, %arg7: memref<1xf32, #tpu.memory_space<smem>>, %arg8: memref<1x128xf32, #tpu.memory_space<vmem>>) attributes {dimension_semantics = [#tpu.dimension_semantics<parallel>], iteration_bounds = array<i64: 1>, scalar_prefetch = 0 : i64, scratch_operands = 0 : i64, tpu.core_type = #tpu.core_type<tc>, window_params = [{transform_indices = @transform_0, window_bounds = array<i64: 128, 32>}, {pipeline_mode = #tpu.pipeline_mode<synchronous>, transform_indices = @transform_1, window_bounds = array<i64: 128, 32>}, {pipeline_mode = #tpu.pipeline_mode<synchronous>, transform_indices = @transform_2, window_bounds = array<i64: 128, 1>}, {pipeline_mode = #tpu.pipeline_mode<synchronous>, transform_indices = @transform_3, window_bounds = array<i64: 64, 128>}, {pipeline_mode = #tpu.pipeline_mode<synchronous>, transform_indices = @transform_4, window_bounds = array<i64: 64, 1>}, {pipeline_mode = #tpu.pipeline_mode<synchronous>, transform_indices = @transform_5, window_bounds = array<i64: 64, 1>}, {transform_indices = @transform_6, window_bounds = array<i64: 1>}, {transform_indices = @transform_7, window_bounds = array<i64: 1, 128>}]} {
    %c0 = arith.constant 0 : index
    %c0_0 = arith.constant 0 : index
    %0 = vector.load %arg1[%c0, %c0_0] : memref<128x32xf32, #tpu.memory_space<vmem>>, vector<128x32xf32>
    %1 = tpu.transpose %0, [1, 0] : vector<128x32xf32> -> vector<32x128xf32>
    %c0_1 = arith.constant 0 : index
    %c0_2 = arith.constant 0 : index
    %2 = vector.load %arg2[%c0_1, %c0_2] : memref<128x32xf32, #tpu.memory_space<vmem>>, vector<128x32xf32>
    %cst = arith.constant dense<0.000000e+00> : vector<128x128xf32>
    %3 = tpu.matmul %2, %1, %cst {dimension_numbers = #tpu.dot_dimension_numbers<[1], [0], [0], [1], [0, 0, 1, 1], [], []>} : vector<128x32xf32>, vector<32x128xf32>, vector<128x128xf32> -> vector<128x128xf32>
    %c0_3 = arith.constant 0 : index
    %c0_4 = arith.constant 0 : index
    %4 = vector.load %arg3[%c0_3, %c0_4] : memref<128x1xf32, #tpu.memory_space<vmem>>, vector<128x1xf32>
    %5 = vector.broadcast %4 : vector<128x1xf32> to vector<128x128xf32>
    %6 = arith.addf %3, %5 : vector<128x128xf32>
    %cst_5 = arith.constant 0.000000e+00 : f32
    %7 = vector.broadcast %cst_5 : f32 to vector<128x128xf32>
    %8 = arith.maximumf %6, %7 : vector<128x128xf32>
    %c0_6 = arith.constant 0 : index
    %c0_7 = arith.constant 0 : index
    %9 = vector.load %arg4[%c0_6, %c0_7] : memref<64x128xf32, #tpu.memory_space<vmem>>, vector<64x128xf32>
    %cst_8 = arith.constant dense<0.000000e+00> : vector<64x128xf32>
    %10 = tpu.matmul %9, %8, %cst_8 {dimension_numbers = #tpu.dot_dimension_numbers<[1], [0], [0], [1], [0, 0, 1, 1], [], []>} : vector<64x128xf32>, vector<128x128xf32>, vector<64x128xf32> -> vector<64x128xf32>
    %c0_9 = arith.constant 0 : index
    %c0_10 = arith.constant 0 : index
    %11 = vector.load %arg5[%c0_9, %c0_10] : memref<64x1xf32, #tpu.memory_space<vmem>>, vector<64x1xf32>
    %12 = vector.broadcast %11 : vector<64x1xf32> to vector<64x128xf32>
    %13 = arith.addf %10, %12 : vector<64x128xf32>
    %cst_11 = arith.constant 0.000000e+00 : f32
    %14 = vector.broadcast %cst_11 : f32 to vector<64x128xf32>
    %15 = arith.maximumf %13, %14 : vector<64x128xf32>
    %c0_12 = arith.constant 0 : index
    %c0_13 = arith.constant 0 : index
    %16 = vector.load %arg6[%c0_12, %c0_13] : memref<64x1xf32, #tpu.memory_space<vmem>>, vector<64x1xf32>
    %17 = vector.broadcast %16 : vector<64x1xf32> to vector<64x128xf32>
    %18 = arith.mulf %15, %17 : vector<64x128xf32>
    %cst_14 = arith.constant dense<0.000000e+00> : vector<128xf32>
    %19 = vector.multi_reduction <add>, %18, %cst_14 [0] : vector<64x128xf32> to vector<128xf32>
    %20 = vector.shape_cast %19 : vector<128xf32> to vector<1x128xf32>
    %c0_15 = arith.constant 0 : index
    %21 = memref.load %arg7[%c0_15] : memref<1xf32, #tpu.memory_space<smem>>
    %22 = vector.broadcast %21 : f32 to vector<1x128xf32>
    %23 = arith.addf %20, %22 : vector<1x128xf32>
    %24 = math.tanh %23 : vector<1x128xf32>
    %cst_16 = arith.constant 2.000000e+00 : f32
    %25 = vector.broadcast %cst_16 : f32 to vector<1x128xf32>
    %26 = arith.mulf %24, %25 : vector<1x128xf32>
    %c0_17 = arith.constant 0 : index
    %c0_18 = arith.constant 0 : index
    %27 = vector.load %arg8[%c0_17, %c0_18] : memref<1x128xf32, #tpu.memory_space<vmem>>, vector<1x128xf32>
    tpu.vector_store %arg8[%c0_17, %c0_18], %26 {strides = array<i32>} : memref<1x128xf32, #tpu.memory_space<vmem>>, vector<1x128xf32>,
    return
  }
  func.func @transform_0(%arg0: i32) -> (i32, i32) {
    %c0_i32 = arith.constant 0 : i32
    %c0_i32_0 = arith.constant 0 : i32
    return %arg0, %c0_i32 : i32, i32
  }
  func.func @transform_1(%arg0: i32) -> (i32, i32) {
    %c0_i32 = arith.constant 0 : i32
    %c0_i32_0 = arith.constant 0 : i32
    %c0_i32_1 = arith.constant 0 : i32
    return %c0_i32, %c0_i32_0 : i32, i32
  }
  func.func @transform_2(%arg0: i32) -> (i32, i32) {
    %c0_i32 = arith.constant 0 : i32
    %c0_i32_0 = arith.constant 0 : i32
    %c0_i32_1 = arith.constant 0 : i32
    return %c0_i32, %c0_i32_0 : i32, i32
  }
  func.func @transform_3(%arg0: i32) -> (i32, i32) {
    %c0_i32 = arith.constant 0 : i32
    %c0_i32_0 = arith.constant 0 : i32
    %c0_i32_1 = arith.constant 0 : i32
    return %c0_i32, %c0_i32_0 : i32, i32
  }
  func.func @transform_4(%arg0: i32) -> (i32, i32) {
    %c0_i32 = arith.constant 0 : i32
    %c0_i32_0 = arith.constant 0 : i32
    %c0_i32_1 = arith.constant 0 : i32
    return %c0_i32, %c0_i32_0 : i32, i32
  }
  func.func @transform_5(%arg0: i32) -> (i32, i32) {
    %c0_i32 = arith.constant 0 : i32
    %c0_i32_0 = arith.constant 0 : i32
    %c0_i32_1 = arith.constant 0 : i32
    return %c0_i32, %c0_i32_0 : i32, i32
  }
  func.func @transform_6(%arg0: i32) -> i32 {
    %c0_i32 = arith.constant 0 : i32
    %c0_i32_0 = arith.constant 0 : i32
    return %c0_i32 : i32
  }
  func.func @transform_7(%arg0: i32) -> (i32, i32) {
    %c0_i32 = arith.constant 0 : i32
    %c0_i32_0 = arith.constant 0 : i32
    return %c0_i32, %arg0 : i32, i32
  }
}

</mosaic_0001>

<llo_original>
// kernel: tpu_custom_call.1
$region0: #{tpu_custom_call.1}
  #allocation0 [shape = 'u32[]', space=smem, size = 0x4, offset = 0x4, fixed_abs, tag = 'smem constant byte address 0x4 - core index']
  #allocation1 [shape = 'u32[144,128]{1,0:T(1,128)}', space=vmem, size = 0x12000, scoped, tag = 'internal scratch']
  #allocation2 [shape = 'f32[1]{0:T(128)S(6)}', space=smem, size = 0x200, scoped, tag = 'scoped memory for tpu_custom_call.1']
  %s0 = inlined_call_operand.vmem [shape: f32[128,32], index: 0, kind: input, shape index: {}]
  %s1 = inlined_call_operand.vmem [shape: f32[128,32], index: 1, kind: input, shape index: {}]
  %s2 = inlined_call_operand.vmem [shape: f32[128,1], index: 2, kind: input, shape index: {}]
  %s3 = inlined_call_operand.vmem [shape: f32[64,128], index: 3, kind: input, shape index: {}]
  %s4 = inlined_call_operand.vmem [shape: f32[64,1], index: 4, kind: input, shape index: {}]
  %s5 = inlined_call_operand.vmem [shape: f32[64,1], index: 5, kind: input, shape index: {}]
  %s6 = inlined_call_operand.<no memory space> [shape: f32[1], index: 6, kind: input, shape index: {}]
  %s7 = inlined_call_operand.hbm [shape: f32[1,128], index: 7, kind: output, shape index: {}]
  %s8 = sld [smem:[#allocation0]]
  $region38: #{tpu_custom_call.1} parent=0
    _
  %s10 = ssub.s32 1, %s8
  %s11 = scalar_select 0, %s10, %s8
  %12 = sst [smem:[#allocation2]] %s6
  $region1: #{tpu_custom_call.1} parent=0
    #allocation3 [shape = 'u8[512]{0}', space=vmem, size = 0x400, scoped, tag = 'output window, operand 0, single buffered']
    #allocation4 [shape = 's32[1]{0}', space=sflag, size = 0x4, scoped, tag = 'scoped memory for tpu_custom_call.1']
    %13 = vsyncpa [#allocation4], 0
    // Predicated region
    $region2: #{tpu_custom_call.1} parent=1 // pred_check
      _
    $region3: #{tpu_custom_call.1} parent=1 // pred_check_branch
      %15 = sbr.rel (0) target = $region5
    $region4: #{tpu_custom_call.1} parent=1 // pred_region
      _
    $region5: #{tpu_custom_call.1} parent=1 // pred_fallthru
      _
    // Predicated region
    $region6: #{tpu_custom_call.1} parent=1 // pred_check
      _
    $region7: #{tpu_custom_call.1} parent=1 // pred_check_branch
      %17 = sbr.rel (0) target = $region9
    $region8: #{tpu_custom_call.1} parent=1 // pred_region
      _
    $region9: #{tpu_custom_call.1} parent=1 // pred_fallthru
      _
    // Predicated region
    $region10: #{tpu_custom_call.1} parent=1 // pred_check
      _
    $region11: #{tpu_custom_call.1} parent=1 // pred_check_branch
      %19 = sbr.rel (0) target = $region13
    $region12: #{tpu_custom_call.1} parent=1 // pred_region
      _
    $region13: #{tpu_custom_call.1} parent=1 // pred_fallthru
      _
    // Predicated region
    $region14: #{tpu_custom_call.1} parent=1 // pred_check
      _
    $region15: #{tpu_custom_call.1} parent=1 // pred_check_branch
      %21 = sbr.rel (0) target = $region17
    $region16: #{tpu_custom_call.1} parent=1 // pred_region
      _
    $region17: #{tpu_custom_call.1} parent=1 // pred_fallthru
      _
    // Predicated region
    $region18: #{tpu_custom_call.1} parent=1 // pred_check
      _
    $region19: #{tpu_custom_call.1} parent=1 // pred_check_branch
      %23 = sbr.rel (0) target = $region21
    $region20: #{tpu_custom_call.1} parent=1 // pred_region
      _
    $region21: #{tpu_custom_call.1} parent=1 // pred_fallthru
      _
    // Predicated region
    $region22: #{tpu_custom_call.1} parent=1 // pred_check
      _
    $region23: #{tpu_custom_call.1} parent=1 // pred_check_branch
      %25 = sbr.rel (0) target = $region25
    $region24: #{tpu_custom_call.1} parent=1 // pred_region
      _
    $region25: #{tpu_custom_call.1} parent=1 // pred_fallthru
      _
    // Predicated region
    $region26: #{tpu_custom_call.1} parent=1 // pred_check
      _
    $region27: #{tpu_custom_call.1} parent=1 // pred_check_branch
      %27 = sbr.rel (0) target = $region29
    $region28: #{tpu_custom_call.1} parent=1 // pred_region
      _
    $region29: #{tpu_custom_call.1} parent=1 // pred_fallthru
      _
    %v28 = vld [vmem:[%s0] sm:$0xff]
    %v29 = vld [vmem:[%s0 + $0x8] sm:$0xff]
    %v30 = vld [vmem:[%s0 + $0x10] sm:$0xff]
    %v31 = vld [vmem:[%s0 + $0x18] sm:$0xff]
    %v32 = vld [vmem:[%s0 + $0x20] sm:$0xff]
    %v33 = vld [vmem:[%s0 + $0x28] sm:$0xff]
    %v34 = vld [vmem:[%s0 + $0x30] sm:$0xff]
    %v35 = vld [vmem:[%s0 + $0x38] sm:$0xff]
    %v36 = vld [vmem:[%s0 + $0x40] sm:$0xff]
    %v37 = vld [vmem:[%s0 + $0x48] sm:$0xff]
    %v38 = vld [vmem:[%s0 + $0x50] sm:$0xff]
    %v39 = vld [vmem:[%s0 + $0x58] sm:$0xff]
    %v40 = vld [vmem:[%s0 + $0x60] sm:$0xff]
    %v41 = vld [vmem:[%s0 + $0x68] sm:$0xff]
    %v42 = vld [vmem:[%s0 + $0x70] sm:$0xff]
    %v43 = vld [vmem:[%s0 + $0x78] sm:$0xff]
    %v44 = vld [vmem:[%s1] sm:$0xff]
    %v45 = vld [vmem:[%s1 + $0x8] sm:$0xff]
    %v46 = vld [vmem:[%s1 + $0x10] sm:$0xff]
    %v47 = vld [vmem:[%s1 + $0x18] sm:$0xff]
    %v48 = vld [vmem:[%s1 + $0x20] sm:$0xff]
    %v49 = vld [vmem:[%s1 + $0x28] sm:$0xff]
    %v50 = vld [vmem:[%s1 + $0x30] sm:$0xff]
    %v51 = vld [vmem:[%s1 + $0x38] sm:$0xff]
    %v52 = vld [vmem:[%s1 + $0x40] sm:$0xff]
    %v53 = vld [vmem:[%s1 + $0x48] sm:$0xff]
    %v54 = vld [vmem:[%s1 + $0x50] sm:$0xff]
    %v55 = vld [vmem:[%s1 + $0x58] sm:$0xff]
    %v56 = vld [vmem:[%s1 + $0x60] sm:$0xff]
    %v57 = vld [vmem:[%s1 + $0x68] sm:$0xff]
    %v58 = vld [vmem:[%s1 + $0x70] sm:$0xff]
    %v59 = vld [vmem:[%s1 + $0x78] sm:$0xff]
    %v60 = vld [vmem:[%s2] sm:$0xff]
    %v61 = vld [vmem:[%s2 + $0x8] sm:$0xff]
    %v62 = vld [vmem:[%s2 + $0x10] sm:$0xff]
    %v63 = vld [vmem:[%s2 + $0x18] sm:$0xff]
    %v64 = vld [vmem:[%s2 + $0x20] sm:$0xff]
    %v65 = vld [vmem:[%s2 + $0x28] sm:$0xff]
    %v66 = vld [vmem:[%s2 + $0x30] sm:$0xff]
    %v67 = vld [vmem:[%s2 + $0x38] sm:$0xff]
    %v68 = vld [vmem:[%s2 + $0x40] sm:$0xff]
    %v69 = vld [vmem:[%s2 + $0x48] sm:$0xff]
    %v70 = vld [vmem:[%s2 + $0x50] sm:$0xff]
    %v71 = vld [vmem:[%s2 + $0x58] sm:$0xff]
    %v72 = vld [vmem:[%s2 + $0x60] sm:$0xff]
    %v73 = vld [vmem:[%s2 + $0x68] sm:$0xff]
    %v74 = vld [vmem:[%s2 + $0x70] sm:$0xff]
    %v75 = vld [vmem:[%s2 + $0x78] sm:$0xff]
    %77 = vset.pattern.permute.xlu0 0
    %78 = vperm.xlu0 %77, %v60
    %v79 = vpop.permute.xlu0 %78
    %82 = vset.pattern.permute.xlu0 0
    %83 = vperm.xlu0 %82, %v61
    %v84 = vpop.permute.xlu0 %83
    %87 = vset.pattern.permute.xlu0 0
    %88 = vperm.xlu0 %87, %v62
    %v89 = vpop.permute.xlu0 %88
    %92 = vset.pattern.permute.xlu0 0
    %93 = vperm.xlu0 %92, %v63
    %v94 = vpop.permute.xlu0 %93
    %97 = vset.pattern.permute.xlu0 0
    %98 = vperm.xlu0 %97, %v64
    %v99 = vpop.permute.xlu0 %98
    %102 = vset.pattern.permute.xlu0 0
    %103 = vperm.xlu0 %102, %v65
    %v104 = vpop.permute.xlu0 %103
    %107 = vset.pattern.permute.xlu0 0
    %108 = vperm.xlu0 %107, %v66
    %v109 = vpop.permute.xlu0 %108
    %112 = vset.pattern.permute.xlu0 0
    %113 = vperm.xlu0 %112, %v67
    %v114 = vpop.permute.xlu0 %113
    %117 = vset.pattern.permute.xlu0 0
    %118 = vperm.xlu0 %117, %v68
    %v119 = vpop.permute.xlu0 %118
    %122 = vset.pattern.permute.xlu0 0
    %123 = vperm.xlu0 %122, %v69
    %v124 = vpop.permute.xlu0 %123
    %127 = vset.pattern.permute.xlu0 0
    %128 = vperm.xlu0 %127, %v70
    %v129 = vpop.permute.xlu0 %128
    %132 = vset.pattern.permute.xlu0 0
    %133 = vperm.xlu0 %132, %v71
    %v134 = vpop.permute.xlu0 %133
    %137 = vset.pattern.permute.xlu0 0
    %138 = vperm.xlu0 %137, %v72
    %v139 = vpop.permute.xlu0 %138
    %142 = vset.pattern.permute.xlu0 0
    %143 = vperm.xlu0 %142, %v73
    %v144 = vpop.permute.xlu0 %143
    %147 = vset.pattern.permute.xlu0 0
    %148 = vperm.xlu0 %147, %v74
    %v149 = vpop.permute.xlu0 %148
    %152 = vset.pattern.permute.xlu0 0
    %153 = vperm.xlu0 %152, %v75
    %v154 = vpop.permute.xlu0 %153
    %vm156 = vcmask 261120
    %v158 = vsel %vm156, %v44, 0
    %v161 = vsel %vm156, %v45, 0
    %v164 = vsel %vm156, %v46, 0
    %v167 = vsel %vm156, %v47, 0
    %v170 = vsel %vm156, %v48, 0
    %v173 = vsel %vm156, %v49, 0
    %v176 = vsel %vm156, %v50, 0
    %v179 = vsel %vm156, %v51, 0
    %v182 = vsel %vm156, %v52, 0
    %v185 = vsel %vm156, %v53, 0
    %v188 = vsel %vm156, %v54, 0
    %v191 = vsel %vm156, %v55, 0
    %v194 = vsel %vm156, %v56, 0
    %v197 = vsel %vm156, %v57, 0
    %v200 = vsel %vm156, %v58, 0
    %v203 = vsel %vm156, %v59, 0
    %v206 = vsel %vm156, %v28, 0
    %v209 = vsel %vm156, %v29, 0
    %v212 = vsel %vm156, %v30, 0
    %v215 = vsel %vm156, %v31, 0
    %v218 = vsel %vm156, %v32, 0
    %v221 = vsel %vm156, %v33, 0
    %v224 = vsel %vm156, %v34, 0
    %v227 = vsel %vm156, %v35, 0
    %v230 = vsel %vm156, %v36, 0
    %v233 = vsel %vm156, %v37, 0
    %v236 = vsel %vm156, %v38, 0
    %v239 = vsel %vm156, %v39, 0
    %v242 = vsel %vm156, %v40, 0
    %v245 = vsel %vm156, %v41, 0
    %v248 = vsel %vm156, %v42, 0
    %v251 = vsel %vm156, %v43, 0
    %253 = vmatprep.subr.mxu0 0.0
    %254 = vmatpush1.xpose.msra.mxu0 %v206
    %255 = vmatprep.subr.mxu0 0.0
    %256 = vmatpush1.xpose.msra.mxu0 %v209
    %257 = vmatprep.subr.mxu0 0.0
    %258 = vmatpush1.xpose.msra.mxu0 %v212
    %259 = vmatprep.subr.mxu0 0.0
    %260 = vmatpush1.xpose.msra.mxu0 %v215
    %261 = vmatprep.subr.mxu0 0.0
    %262 = vmatpush1.xpose.msra.mxu0 %v218
    %263 = vmatprep.subr.mxu0 0.0
    %264 = vmatpush1.xpose.msra.mxu0 %v221
    %265 = vmatprep.subr.mxu0 0.0
    %266 = vmatpush1.xpose.msra.mxu0 %v224
    %267 = vmatprep.subr.mxu0 0.0
    %268 = vmatpush1.xpose.msra.mxu0 %v227
    %269 = vmatprep.subr.mxu0 0.0
    %270 = vmatpush1.xpose.msra.mxu0 %v230
    %271 = vmatprep.subr.mxu0 0.0
    %272 = vmatpush1.xpose.msra.mxu0 %v233
    %273 = vmatprep.subr.mxu0 0.0
    %274 = vmatpush1.xpose.msra.mxu0 %v236
    %275 = vmatprep.subr.mxu0 0.0
    %276 = vmatpush1.xpose.msra.mxu0 %v239
    %277 = vmatprep.subr.mxu0 0.0
    %278 = vmatpush1.xpose.msra.mxu0 %v242
    %279 = vmatprep.subr.mxu0 0.0
    %280 = vmatpush1.xpose.msra.mxu0 %v245
    %281 = vmatprep.subr.mxu0 0.0
    %282 = vmatpush1.xpose.msra.mxu0 %v248
    %283 = vmatprep.subr.mxu0 0.0
    %284 = vmatpush1.xpose.msra.mxu0 %v251
    %285 = vmatprep.subr.mxu0 0.0
    %286 = vmatpush1.xpose.msra.mxu0 0.0
    %287 = vmatprep.subr.mxu0 0.0
    %288 = vmatpush1.xpose.msra.mxu0 0.0
    %289 = vmatprep.subr.mxu0 0.0
    %290 = vmatpush1.xpose.msra.mxu0 0.0
    %291 = vmatprep.subr.mxu0 0.0
    %292 = vmatpush1.xpose.msra.mxu0 0.0
    %293 = vmatprep.subr.mxu0 0.0
    %294 = vmatpush1.xpose.msra.mxu0 0.0
    %295 = vmatprep.subr.mxu0 0.0
    %296 = vmatpush1.xpose.msra.mxu0 0.0
    %297 = vmatprep.subr.mxu0 0.0
    %298 = vmatpush1.xpose.msra.mxu0 0.0
    %299 = vmatprep.subr.mxu0 0.0
    %300 = vmatpush1.xpose.msra.mxu0 0.0
    %301 = vmatprep.subr.mxu0 0.0
    %302 = vmatpush1.xpose.msra.mxu0 0.0
    %303 = vmatprep.subr.mxu0 0.0
    %304 = vmatpush1.xpose.msra.mxu0 0.0
    %305 = vmatprep.subr.mxu0 0.0
    %306 = vmatpush1.xpose.msra.mxu0 0.0
    %307 = vmatprep.subr.mxu0 0.0
    %308 = vmatpush1.xpose.msra.mxu0 0.0
    %309 = vmatprep.subr.mxu0 0.0
    %310 = vmatpush1.xpose.msra.mxu0 0.0
    %311 = vmatprep.subr.mxu0 0.0
    %312 = vmatpush1.xpose.msra.mxu0 0.0
    %313 = vmatprep.subr.mxu0 0.0
    %314 = vmatpush1.xpose.msra.mxu0 0.0
    %315 = vmatprep.subr.mxu0 0.0
    %316 = vmatpush1.xpose.msra.mxu0 0.0
    %317 = vmatprep.mubr.f32.mxu0 0.0
    %318 = vmatmul.mubr.f32.gmra.mrb[0].mxu0 %v158
    %v319 = vpop.f32.mrb[0].mxu0
    %v320 = vadd.f32 %v79, %v319
    %v321 = vpop.f32.mrb[0].mxu0
    %322 = vmatprep.mubr.f32.mxu0 0.0
    %323 = vmatmul.mubr.f32.gmra.mrb[0].mxu0 %v161
    %v324 = vpop.f32.mrb[0].mxu0
    %v325 = vadd.f32 %v84, %v324
    %v326 = vpop.f32.mrb[0].mxu0
    %327 = vmatprep.mubr.f32.mxu0 0.0
    %328 = vmatmul.mubr.f32.gmra.mrb[0].mxu0 %v164
    %v329 = vpop.f32.mrb[0].mxu0
    %v330 = vadd.f32 %v89, %v329
    %v331 = vpop.f32.mrb[0].mxu0
    %332 = vmatprep.mubr.f32.mxu0 0.0
    %333 = vmatmul.mubr.f32.gmra.mrb[0].mxu0 %v167
    %v334 = vpop.f32.mrb[0].mxu0
    %v335 = vadd.f32 %v94, %v334
    %v336 = vpop.f32.mrb[0].mxu0
    %337 = vmatprep.mubr.f32.mxu0 0.0
    %338 = vmatmul.mubr.f32.gmra.mrb[0].mxu0 %v170
    %v339 = vpop.f32.mrb[0].mxu0
    %v340 = vadd.f32 %v99, %v339
    %v341 = vpop.f32.mrb[0].mxu0
    %342 = vmatprep.mubr.f32.mxu0 0.0
    %343 = vmatmul.mubr.f32.gmra.mrb[0].mxu0 %v173
    %v344 = vpop.f32.mrb[0].mxu0
    %v345 = vadd.f32 %v104, %v344
    %v346 = vpop.f32.mrb[0].mxu0
    %347 = vmatprep.mubr.f32.mxu0 0.0
    %348 = vmatmul.mubr.f32.gmra.mrb[0].mxu0 %v176
    %v349 = vpop.f32.mrb[0].mxu0
    %v350 = vadd.f32 %v109, %v349
    %v351 = vpop.f32.mrb[0].mxu0
    %352 = vmatprep.mubr.f32.mxu0 0.0
    %353 = vmatmul.mubr.f32.gmra.mrb[0].mxu0 %v179
    %v354 = vpop.f32.mrb[0].mxu0
    %v355 = vadd.f32 %v114, %v354
    %v356 = vpop.f32.mrb[0].mxu0
    %357 = vmatprep.mubr.f32.mxu0 0.0
    %358 = vmatmul.mubr.f32.gmra.mrb[0].mxu0 %v182
    %v359 = vpop.f32.mrb[0].mxu0
    %v360 = vadd.f32 %v119, %v359
    %v361 = vpop.f32.mrb[0].mxu0
    %362 = vmatprep.mubr.f32.mxu0 0.0
    %363 = vmatmul.mubr.f32.gmra.mrb[0].mxu0 %v185
    %v364 = vpop.f32.mrb[0].mxu0
    %v365 = vadd.f32 %v124, %v364
    %v366 = vpop.f32.mrb[0].mxu0
    %367 = vmatprep.mubr.f32.mxu0 0.0
    %368 = vmatmul.mubr.f32.gmra.mrb[0].mxu0 %v188
    %v369 = vpop.f32.mrb[0].mxu0
    %v370 = vadd.f32 %v129, %v369
    %v371 = vpop.f32.mrb[0].mxu0
    %372 = vmatprep.mubr.f32.mxu0 0.0
    %373 = vmatmul.mubr.f32.gmra.mrb[0].mxu0 %v191
    %v374 = vpop.f32.mrb[0].mxu0
    %v375 = vadd.f32 %v134, %v374
    %v376 = vpop.f32.mrb[0].mxu0
    %377 = vmatprep.mubr.f32.mxu0 0.0
    %378 = vmatmul.mubr.f32.gmra.mrb[0].mxu0 %v194
    %v379 = vpop.f32.mrb[0].mxu0
    %v380 = vadd.f32 %v139, %v379
    %v381 = vpop.f32.mrb[0].mxu0
    %382 = vmatprep.mubr.f32.mxu0 0.0
    %383 = vmatmul.mubr.f32.gmra.mrb[0].mxu0 %v197
    %v384 = vpop.f32.mrb[0].mxu0
    %v385 = vadd.f32 %v144, %v384
    %v386 = vpop.f32.mrb[0].mxu0
    %387 = vmatprep.mubr.f32.mxu0 0.0
    %388 = vmatmul.mubr.f32.gmra.mrb[0].mxu0 %v200
    %v389 = vpop.f32.mrb[0].mxu0
    %v390 = vadd.f32 %v149, %v389
    %v391 = vpop.f32.mrb[0].mxu0
    %392 = vmatprep.mubr.f32.mxu0 0.0
    %393 = vmatmul.mubr.f32.gmra.mrb[0].mxu0 %v203
    %v394 = vpop.f32.mrb[0].mxu0
    %v395 = vadd.f32 %v154, %v394
    %v396 = vpop.f32.mrb[0].mxu0
    %397 = vdwg.mxu0
    %v398 = vmax.f32 %v320, 0.0
    %v399 = vmax.f32 %v325, 0.0
    %v400 = vmax.f32 %v330, 0.0
    %v401 = vmax.f32 %v335, 0.0
    %v402 = vmax.f32 %v340, 0.0
    %v403 = vmax.f32 %v345, 0.0
    %v404 = vmax.f32 %v350, 0.0
    %v405 = vmax.f32 %v355, 0.0
    %v406 = vmax.f32 %v360, 0.0
    %v407 = vmax.f32 %v365, 0.0
    %v408 = vmax.f32 %v370, 0.0
    %v409 = vmax.f32 %v375, 0.0
    %v410 = vmax.f32 %v380, 0.0
    %v411 = vmax.f32 %v385, 0.0
    %v412 = vmax.f32 %v390, 0.0
    %v413 = vmax.f32 %v395, 0.0
    %v414 = vld [vmem:[%s3] sm:$0xff]
    %v415 = vld [vmem:[%s3 + $0x8] sm:$0xff]
    %v416 = vld [vmem:[%s3 + $0x10] sm:$0xff]
    %v417 = vld [vmem:[%s3 + $0x18] sm:$0xff]
    %v418 = vld [vmem:[%s3 + $0x20] sm:$0xff]
    %v419 = vld [vmem:[%s3 + $0x28] sm:$0xff]
    %v420 = vld [vmem:[%s3 + $0x30] sm:$0xff]
    %v421 = vld [vmem:[%s3 + $0x38] sm:$0xff]
    %v422 = vld [vmem:[%s4] sm:$0xff]
    %v423 = vld [vmem:[%s4 + $0x8] sm:$0xff]
    %v424 = vld [vmem:[%s4 + $0x10] sm:$0xff]
    %v425 = vld [vmem:[%s4 + $0x18] sm:$0xff]
    %v426 = vld [vmem:[%s4 + $0x20] sm:$0xff]
    %v427 = vld [vmem:[%s4 + $0x28] sm:$0xff]
    %v428 = vld [vmem:[%s4 + $0x30] sm:$0xff]
    %v429 = vld [vmem:[%s4 + $0x38] sm:$0xff]
    %431 = vset.pattern.permute.xlu0 0
    %432 = vperm.xlu0 %431, %v422
    %v433 = vpop.permute.xlu0 %432
    %436 = vset.pattern.permute.xlu0 0
    %437 = vperm.xlu0 %436, %v423
    %v438 = vpop.permute.xlu0 %437
    %441 = vset.pattern.permute.xlu0 0
    %442 = vperm.xlu0 %441, %v424
    %v443 = vpop.permute.xlu0 %442
    %446 = vset.pattern.permute.xlu0 0
    %447 = vperm.xlu0 %446, %v425
    %v448 = vpop.permute.xlu0 %447
    %451 = vset.pattern.permute.xlu0 0
    %452 = vperm.xlu0 %451, %v426
    %v453 = vpop.permute.xlu0 %452
    %456 = vset.pattern.permute.xlu0 0
    %457 = vperm.xlu0 %456, %v427
    %v458 = vpop.permute.xlu0 %457
    %461 = vset.pattern.permute.xlu0 0
    %462 = vperm.xlu0 %461, %v428
    %v463 = vpop.permute.xlu0 %462
    %466 = vset.pattern.permute.xlu0 0
    %467 = vperm.xlu0 %466, %v429
    %v468 = vpop.permute.xlu0 %467
    %470 = vmatprep.subr.mxu0 0.0
    %471 = vmatpush1.msra.mxu0 %v398
    %472 = vmatprep.subr.mxu0 0.0
    %473 = vmatpush1.msra.mxu0 %v399
    %474 = vmatprep.subr.mxu0 0.0
    %475 = vmatpush1.msra.mxu0 %v400
    %476 = vmatprep.subr.mxu0 0.0
    %477 = vmatpush1.msra.mxu0 %v401
    %478 = vmatprep.subr.mxu0 0.0
    %479 = vmatpush1.msra.mxu0 %v402
    %480 = vmatprep.subr.mxu0 0.0
    %481 = vmatpush1.msra.mxu0 %v403
    %482 = vmatprep.subr.mxu0 0.0
    %483 = vmatpush1.msra.mxu0 %v404
    %484 = vmatprep.subr.mxu0 0.0
    %485 = vmatpush1.msra.mxu0 %v405
    %486 = vmatprep.subr.mxu0 0.0
    %487 = vmatpush1.msra.mxu0 %v406
    %488 = vmatprep.subr.mxu0 0.0
    %489 = vmatpush1.msra.mxu0 %v407
    %490 = vmatprep.subr.mxu0 0.0
    %491 = vmatpush1.msra.mxu0 %v408
    %492 = vmatprep.subr.mxu0 0.0
    %493 = vmatpush1.msra.mxu0 %v409
    %494 = vmatprep.subr.mxu0 0.0
    %495 = vmatpush1.msra.mxu0 %v410
    %496 = vmatprep.subr.mxu0 0.0
    %497 = vmatpush1.msra.mxu0 %v411
    %498 = vmatprep.subr.mxu0 0.0
    %499 = vmatpush1.msra.mxu0 %v412
    %500 = vmatprep.subr.mxu0 0.0
    %501 = vmatpush1.msra.mxu0 %v413
    %502 = vmatprep.subr.mxu0 0.0
    %503 = vmatpush1.msra.mxu0 0.0
    %504 = vmatprep.subr.mxu0 0.0
    %505 = vmatpush1.msra.mxu0 0.0
    %506 = vmatprep.subr.mxu0 0.0
    %507 = vmatpush1.msra.mxu0 0.0
    %508 = vmatprep.subr.mxu0 0.0
    %509 = vmatpush1.msra.mxu0 0.0
    %510 = vmatprep.subr.mxu0 0.0
    %511 = vmatpush1.msra.mxu0 0.0
    %512 = vmatprep.subr.mxu0 0.0
    %513 = vmatpush1.msra.mxu0 0.0
    %514 = vmatprep.subr.mxu0 0.0
    %515 = vmatpush1.msra.mxu0 0.0
    %516 = vmatprep.subr.mxu0 0.0
    %517 = vmatpush1.msra.mxu0 0.0
    %518 = vmatprep.subr.mxu0 0.0
    %519 = vmatpush1.msra.mxu0 0.0
    %520 = vmatprep.subr.mxu0 0.0
    %521 = vmatpush1.msra.mxu0 0.0
    %522 = vmatprep.subr.mxu0 0.0
    %523 = vmatpush1.msra.mxu0 0.0
    %524 = vmatprep.subr.mxu0 0.0
    %525 = vmatpush1.msra.mxu0 0.0
    %526 = vmatprep.subr.mxu0 0.0
    %527 = vmatpush1.msra.mxu0 0.0
    %528 = vmatprep.subr.mxu0 0.0
    %529 = vmatpush1.msra.mxu0 0.0
    %530 = vmatprep.subr.mxu0 0.0
    %531 = vmatpush1.msra.mxu0 0.0
    %532 = vmatprep.subr.mxu0 0.0
    %533 = vmatpush1.msra.mxu0 0.0
    %534 = vmatprep.mubr.f32.mxu0 0.0
    %535 = vmatmul.mubr.f32.gmra.mrb[0].mxu0 %v414
    %v536 = vpop.f32.mrb[0].mxu0
    %v537 = vadd.f32 %v433, %v536
    %v538 = vpop.f32.mrb[0].mxu0
    %539 = vmatprep.mubr.f32.mxu0 0.0
    %540 = vmatmul.mubr.f32.gmra.mrb[0].mxu0 %v415
    %v541 = vpop.f32.mrb[0].mxu0
    %v542 = vadd.f32 %v438, %v541
    %v543 = vpop.f32.mrb[0].mxu0
    %544 = vmatprep.mubr.f32.mxu0 0.0
    %545 = vmatmul.mubr.f32.gmra.mrb[0].mxu0 %v416
    %v546 = vpop.f32.mrb[0].mxu0
    %v547 = vadd.f32 %v443, %v546
    %v548 = vpop.f32.mrb[0].mxu0
    %549 = vmatprep.mubr.f32.mxu0 0.0
    %550 = vmatmul.mubr.f32.gmra.mrb[0].mxu0 %v417
    %v551 = vpop.f32.mrb[0].mxu0
    %v552 = vadd.f32 %v448, %v551
    %v553 = vpop.f32.mrb[0].mxu0
    %554 = vmatprep.mubr.f32.mxu0 0.0
    %555 = vmatmul.mubr.f32.gmra.mrb[0].mxu0 %v418
    %v556 = vpop.f32.mrb[0].mxu0
    %v557 = vadd.f32 %v453, %v556
    %v558 = vpop.f32.mrb[0].mxu0
    %559 = vmatprep.mubr.f32.mxu0 0.0
    %560 = vmatmul.mubr.f32.gmra.mrb[0].mxu0 %v419
    %v561 = vpop.f32.mrb[0].mxu0
    %v562 = vadd.f32 %v458, %v561
    %v563 = vpop.f32.mrb[0].mxu0
    %564 = vmatprep.mubr.f32.mxu0 0.0
    %565 = vmatmul.mubr.f32.gmra.mrb[0].mxu0 %v420
    %v566 = vpop.f32.mrb[0].mxu0
    %v567 = vadd.f32 %v463, %v566
    %v568 = vpop.f32.mrb[0].mxu0
    %569 = vmatprep.mubr.f32.mxu0 0.0
    %570 = vmatmul.mubr.f32.gmra.mrb[0].mxu0 %v421
    %v571 = vpop.f32.mrb[0].mxu0
    %v572 = vadd.f32 %v468, %v571
    %v573 = vpop.f32.mrb[0].mxu0
    %574 = vdwg.mxu0
    %v575 = vmax.f32 %v537, 0.0
    %v576 = vmax.f32 %v542, 0.0
    %v577 = vmax.f32 %v547, 0.0
    %v578 = vmax.f32 %v552, 0.0
    %v579 = vmax.f32 %v557, 0.0
    %v580 = vmax.f32 %v562, 0.0
    %v581 = vmax.f32 %v567, 0.0
    %v582 = vmax.f32 %v572, 0.0
    %v583 = vld [vmem:[%s5] sm:$0xff]
    %v584 = vld [vmem:[%s5 + $0x8] sm:$0xff]
    %v585 = vld [vmem:[%s5 + $0x10] sm:$0xff]
    %v586 = vld [vmem:[%s5 + $0x18] sm:$0xff]
    %v587 = vld [vmem:[%s5 + $0x20] sm:$0xff]
    %v588 = vld [vmem:[%s5 + $0x28] sm:$0xff]
    %v589 = vld [vmem:[%s5 + $0x30] sm:$0xff]
    %v590 = vld [vmem:[%s5 + $0x38] sm:$0xff]
    %592 = vset.pattern.permute.xlu0 0
    %593 = vperm.xlu0 %592, %v583
    %v594 = vpop.permute.xlu0 %593
    %597 = vset.pattern.permute.xlu0 0
    %598 = vperm.xlu0 %597, %v584
    %v599 = vpop.permute.xlu0 %598
    %602 = vset.pattern.permute.xlu0 0
    %603 = vperm.xlu0 %602, %v585
    %v604 = vpop.permute.xlu0 %603
    %607 = vset.pattern.permute.xlu0 0
    %608 = vperm.xlu0 %607, %v586
    %v609 = vpop.permute.xlu0 %608
    %612 = vset.pattern.permute.xlu0 0
    %613 = vperm.xlu0 %612, %v587
    %v614 = vpop.permute.xlu0 %613
    %617 = vset.pattern.permute.xlu0 0
    %618 = vperm.xlu0 %617, %v588
    %v619 = vpop.permute.xlu0 %618
    %622 = vset.pattern.permute.xlu0 0
    %623 = vperm.xlu0 %622, %v589
    %v624 = vpop.permute.xlu0 %623
    %627 = vset.pattern.permute.xlu0 0
    %628 = vperm.xlu0 %627, %v590
    %v629 = vpop.permute.xlu0 %628
    %v631 = vmul.f32 %v575, %v594
    %v632 = vmul.f32 %v576, %v599
    %v633 = vmul.f32 %v577, %v604
    %v634 = vmul.f32 %v578, %v609
    %v635 = vmul.f32 %v579, %v614
    %v636 = vmul.f32 %v580, %v619
    %v637 = vmul.f32 %v581, %v624
    %v638 = vmul.f32 %v582, %v629
    %v639 = vadd.f32 %v631, %v632
    %v640 = vadd.f32 %v639, %v633
    %v641 = vadd.f32 %v640, %v634
    %v642 = vadd.f32 %v641, %v635
    %v643 = vadd.f32 %v642, %v636
    %v644 = vadd.f32 %v643, %v637
    %v645 = vadd.f32 %v644, %v638
    %v646 = vrot.slane %v645, 4
    %v647 = vadd.f32 %v645, %v646
    %v648 = vrot.slane %v647, 2
    %v649 = vadd.f32 %v647, %v648
    %v650 = vrot.slane %v649, 1
    %v651 = vadd.f32 %v649, %v650
    %s652 = sld [smem:[#allocation2]]
    %v653 = vstv %s652
    %v654 = vadd.f32 %v651, %v653
    %v655 = vtanh.pop %v654
    %v656 = vmul.f32 %v655, 2.0
    %657 = vst [vmem:[#allocation3] sm:$0x1] %v656
    // Predicated region
    $region30: #{tpu_custom_call.1} parent=1 // pred_check
      _
    $region31: #{tpu_custom_call.1} parent=1 // pred_check_branch
      %659 = sbr.rel (0) target = $region33
    $region32: #{tpu_custom_call.1} parent=1 // pred_region
      %s661 = ssub.s32 16, 16
      %662 = vsyncadd [#allocation4], %s661
      %s664 = sshll.u32 [#allocation3], 4
      %s665 = int_to_ptr.vmem [resolvable:$true] %s664
      %667 = dma.vmem_to_hbm [thread:$0]  %s665, 16, %s7, [#allocation4]
    $region33: #{tpu_custom_call.1} parent=1 // pred_fallthru
      _
    // Predicated region
    $region34: #{tpu_custom_call.1} parent=1 // pred_check
      _
    $region35: #{tpu_custom_call.1} parent=1 // pred_check_branch
      %669 = sbr.rel (0) target = $region37
    $region36: #{tpu_custom_call.1} parent=1 // pred_region
      %670 = dma.done [#allocation4], 16
    $region37: #{tpu_custom_call.1} parent=1 // pred_fallthru
      _
    %671 = vsyncpa [#allocation4], 1

</llo_original>
